<compile_context>
chip_gen: v7x
topology: tpu7x:2x2x1
jax: 0.10.0
libtpu: 0.0.40
codegen_flags: <defaults>
</compile_context>

<pallas_src>
import functools

import numpy as np
import jax
import jax.numpy as jnp
from jax.experimental import pallas as pl
from jax.experimental.pallas import tpu as pltpu

EPS = 1e-12
_SQRT2_INV = 0.7071067811865476
_DS = 8  # SMFA down_scale


def _gelu(x):
    # exact (erf-based) GELU, matching torch.nn.GELU() default
    return 0.5 * x * (1.0 + jax.lax.erf(x * _SQRT2_INV))


# -------------------- pltpu.roll direction probe (run once) -------------------
_ROLL_CACHE = {}


def _roll_is_numpy():
    """True if pltpu.roll follows np.roll convention (positive shift moves
    elements toward higher indices). One trivial kernel, run once outside jit."""
    if "v" not in _ROLL_CACHE:
        def k(x_ref, o_ref):
            o_ref[...] = pltpu.roll(x_ref[...], 1, axis=1)

        x = jnp.tile(jnp.arange(128, dtype=jnp.float32)[None, :], (8, 1))
        out = pl.pallas_call(
            k, out_shape=jax.ShapeDtypeStruct((8, 128), jnp.float32))(x)
        _ROLL_CACHE["v"] = bool(out[0, 0] == 127.0)
    return _ROLL_CACHE["v"]


# ----------------------------- fused Pallas kernel ----------------------------

def _fmb_kernel(x_ref, wcx_ref, dw_ref, ldem_ref, ldep1_ref, pc1_ref, pc2_ref,
                ball_ref, sel9_ref, up_ref, o_ref,
                *, H, W, C, hidden, p_dim, roll_numpy):
    f32 = jnp.float32
    S = H * W
    Hs, Ws = H // _DS, W // _DS
    HsWs = Hs * Ws

    x = x_ref[0]                                     # (C, S) channel-major image

    # ---- unpack packed weights / biases (static, sublane-aligned slices) ----
    wcx = wcx_ref[...]
    w_l0 = wcx[:2 * C]
    w_l1 = wcx[2 * C:3 * C]
    w_l2 = wcx[3 * C:4 * C]
    w_p0 = wcx[4 * C:4 * C + hidden]

    ball = ball_ref[...]
    off = 0
    b_l0 = ball[off:off + 2 * C]; off += 2 * C
    b_l1 = ball[off:off + C]; off += C
    b_l2 = ball[off:off + C]; off += C
    b_dw = ball[off:off + C]; off += C
    b_lde0 = ball[off:off + 2 * C]; off += 2 * C
    b_lde1 = ball[off:off + C]; off += C
    b_p0 = ball[off:off + hidden]; off += hidden
    b_p1 = ball[off:off + p_dim]; off += p_dim
    b_p2 = ball[off:off + C]

    # ---- lane coordinates + shared zero-pad masks for the 3x3 taps ----
    pix = jax.lax.broadcasted_iota(jnp.int32, (1, S), 1)
    hh = pix // W
    ww = pix - hh * W

    def _mask(kh, kw):
        conds = []
        if kh == 0:
            conds.append(hh >= 1)
        if kh == 2:
            conds.append(hh <= H - 2)
        if kw == 0:
            conds.append(ww >= 1)
        if kw == 2:
            conds.append(ww <= W - 2)
        if not conds:
            return None
        m = conds[0]
        for c in conds[1:]:
            m = jnp.logical_and(m, c)
        return m

    masks = {(kh, kw): _mask(kh, kw) for kh in range(3) for kw in range(3)}

    def shl(t, k):
        # circular left shift along lanes: out[:, j] = t[:, (j + k) % S]
        k = k % S
        if k == 0:
            return t
        amount = (S - k) if roll_numpy else k
        return pltpu.roll(t, amount, axis=1)

    def tap(t, kh, kw):
        # zero-padded 3x3 tap: out[:, h*W+w] = t[:, (h+kh-1)*W + (w+kw-1)]
        sh = shl(t, (kh - 1) * W + (kw - 1))
        m = masks[(kh, kw)]
        return sh if m is None else jnp.where(m, sh, f32(0))

    def taps9(t):
        # all 9 taps stacked along the sublane axis -> (9*rows, S)
        return jnp.concatenate(
            [tap(t, kh, kw) for kh in range(3) for kw in range(3)], axis=0)

    # ========================== SMFA(F.normalize(x)) ==========================
    ss = jnp.sum(x * x, axis=0, keepdims=True)
    xn = x * jax.lax.rsqrt(jnp.maximum(ss, f32(EPS * EPS)))

    yx = jnp.dot(w_l0, xn, preferred_element_type=f32) + b_l0          # (2C, S)
    y = yx[:C]
    xb = yx[C:]

    # 8x8 adaptive max pool via a segmented roll-and-max scan: each block's max
    # lands on its top-left (anchor) lane.  sel9 then gathers, for every pooled
    # cell, the anchors of its 9 zero-padded 3x3 neighbours in a single dot.
    pm = xb
    step = 1
    while step < _DS:                       # along w: shifts 1, 2, 4
        pm = jnp.maximum(pm, shl(pm, step))
        step *= 2
    step = W
    while step < _DS * W:                   # along h: shifts W, 2W, 4W
        pm = jnp.maximum(pm, shl(pm, step))
        step *= 2
    pooled_taps = jnp.dot(pm, sel9_ref[...], preferred_element_type=f32)  # (C, 9*HsWs)

    # depthwise 3x3 on the pooled grid (tiny (C, HsWs) tile)
    dww = dw_ref[...]                                                  # (C, 9)
    x_s = b_dw
    for t_i in range(9):
        x_s = x_s + dww[:, t_i:t_i + 1] * pooled_taps[:, t_i * HsWs:(t_i + 1) * HsWs]

    # unbiased spatial variance of xb (matches torch.var default)
    s1 = jnp.sum(xb, axis=1, keepdims=True)
    s2 = jnp.sum(xb * xb, axis=1, keepdims=True)
    x_v = (s2 - s1 * s1 * f32(1.0 / S)) * f32(1.0 / (S - 1))           # (C, 1)

    # gate at pooled resolution, nearest-x8 upsample via one membership dot
    gate = _gelu(jnp.dot(w_l1, x_s + x_v, preferred_element_type=f32) + b_l1)
    x_l = xb * jnp.dot(gate, up_ref[...], preferred_element_type=f32)  # (C, S)

    # lde(y): grouped dw-3x3 (x2 multiplier) + 1x1 folded into one (2C, 9C) dot
    h0 = _gelu(jnp.dot(ldem_ref[...], taps9(y), preferred_element_type=f32)
               + b_lde0)                                               # (2C, S)
    y_d = jnp.dot(ldep1_ref[...], h0, preferred_element_type=f32) + b_lde1

    # linear_2(x_l + y_d) + residual
    x1 = jnp.dot(w_l2, x_l + y_d, preferred_element_type=f32) + b_l2 + x

    # ========================== PCFN(F.normalize(x1)) =========================
    ss1 = jnp.sum(x1 * x1, axis=0, keepdims=True)
    x1n = x1 * jax.lax.rsqrt(jnp.maximum(ss1, f32(EPS * EPS)))

    h = _gelu(jnp.dot(w_p0, x1n, preferred_element_type=f32) + b_p0)   # (hidden, S)
    h1c = _gelu(jnp.dot(pc1_ref[...], taps9(h[:p_dim]),
                        preferred_element_type=f32) + b_p1)            # (p_dim, S)
    out = (jnp.dot(pc2_ref[...], jnp.concatenate([h1c, h[p_dim:]], axis=0),
                   preferred_element_type=f32) + b_p2 + x1)
    o_ref[0] = out.astype(o_ref.dtype)


# ----------------------------------- wrapper ----------------------------------

def _const_spec(a):
    nd = a.ndim
    return pl.BlockSpec(a.shape, lambda n, _nd=nd: (0,) * _nd)


def _pool_matrices(H, W):
    """Constant 0/1 matrices describing the 8x8 pooling grid.

    sel9[s, tap*HsWs + b] = 1 iff lane s is the anchor (top-left pixel) of the
      pooled cell that is the tap-th 3x3 neighbour of pooled cell b
      (column all-zero if the neighbour is outside the grid -> zero padding).
    up[b, s] = 1 iff pixel s belongs to pooled cell b (nearest-x8 upsample).
    """
    Hs, Ws = H // _DS, W // _DS
    S, HsWs = H * W, Hs * Ws
    sel9 = np.zeros((S, 9 * HsWs), np.float32)
    for kh in range(3):
        for kw in range(3):
            t = kh * 3 + kw
            for bi in range(Hs):
                for bj in range(Ws):
                    ni, nj = bi + kh - 1, bj + kw - 1
                    if 0 <= ni < Hs and 0 <= nj < Ws:
                        sel9[(ni * _DS) * W + nj * _DS,
                             t * HsWs + bi * Ws + bj] = 1.0
    up = np.zeros((HsWs, S), np.float32)
    for h in range(H):
        for w in range(W):
            up[(h // _DS) * Ws + w // _DS, h * W + w] = 1.0
    return jnp.asarray(sel9), jnp.asarray(up)


def fmb_forward(x_nchw, kparams, roll_numpy=True):
    """x_nchw: (N, C, H, W) float32 (PyTorch layout). kparams from prep_params."""
    N, C, H, W = x_nchw.shape
    assert H % _DS == 0 and W % _DS == 0, "H and W must be divisible by 8"
    S = H * W
    hidden = kparams[5].shape[1]        # pc2_w: (C, hidden)
    p_dim = kparams[4].shape[0]         # pc1_big: (p_dim, 9*p_dim)

    sel9, up = _pool_matrices(H, W)
    operands = list(kparams) + [sel9, up]
    x_flat = x_nchw.reshape(N, C, S)

    in_specs = [pl.BlockSpec((1, C, S), lambda n: (n, 0, 0))]
    in_specs += [_const_spec(a) for a in operands]

    out = pl.pallas_call(
        functools.partial(_fmb_kernel, H=H, W=W, C=C, hidden=hidden,
                          p_dim=p_dim, roll_numpy=roll_numpy),
        out_shape=jax.ShapeDtypeStruct((N, C, S), jnp.float32),
        grid=(N,),
        in_specs=in_specs,
        out_specs=pl.BlockSpec((1, C, S), lambda n: (n, 0, 0)),
        compiler_params=pltpu.CompilerParams(dimension_semantics=("parallel",)),
    )(x_flat, *operands)
    # TODO(synk): before scaling to SR resolutions, add a spatial row-tile grid
    # axis (1-row halo for the 3x3 taps), make the pool/variance two-pass,
    # replace sel9/up with per-tile in-kernel iota builds, set vmem_limit_bytes
    # per generation (v7x: 64 MiB VMEM), and cast dot operands to bf16 on
    # v6e/v7x for ~2x MXU throughput.
    return out.reshape(N, C, H, W)


# ---------------------------------- parameters --------------------------------

def init_params(key, dim, ffn_scale=2.0):
    """Synthetic weights stored in the PyTorch Conv2d layouts."""
    hidden = int(dim * ffn_scale)
    p_dim = int(hidden * 0.25)
    ks = jax.random.split(key, 20)

    def u(k, shape, fan_in):
        b = 1.0 / (fan_in ** 0.5)
        return jax.random.uniform(k, shape, jnp.float32, -b, b)

    p = {
        # SMFA
        "l0_w": u(ks[0], (2 * dim, dim), dim), "l0_b": u(ks[1], (2 * dim,), dim),
        "l1_w": u(ks[2], (dim, dim), dim),     "l1_b": u(ks[3], (dim,), dim),
        "l2_w": u(ks[4], (dim, dim), dim),     "l2_b": u(ks[5], (dim,), dim),
        "dw_w": u(ks[6], (dim, 1, 3, 3), 9),   "dw_b": u(ks[7], (dim,), 9),
        # DMlp (lde): depthwise 3x3 (multiplier 2), then 1x1, 1x1
        "lde_dw_w": u(ks[8], (2 * dim, 1, 3, 3), 9), "lde_dw_b": u(ks[9], (2 * dim,), 9),
        "lde_p0_w": u(ks[10], (2 * dim, 2 * dim), 2 * dim),
        "lde_p0_b": u(ks[11], (2 * dim,), 2 * dim),
        "lde_p1_w": u(ks[12], (dim, 2 * dim), 2 * dim),
        "lde_p1_b": u(ks[13], (dim,), 2 * dim),
        # PCFN
        "p0_w": u(ks[14], (hidden, dim), dim), "p0_b": u(ks[15], (hidden,), dim),
        "p1_w": u(ks[16], (p_dim, p_dim, 3, 3), 9 * p_dim), "p1_b": u(ks[17], (p_dim,), 9 * p_dim),
        "p2_w": u(ks[18], (dim, hidden), hidden), "p2_b": u(ks[19], (dim,), hidden),
    }
    return p, hidden, p_dim


def prep_params(p, dim, hidden, p_dim):
    """Fold / pack the PyTorch-layout weights into the kernel's operand set."""
    C = dim
    f32 = jnp.float32
    col = lambda v: jnp.asarray(v, f32).reshape(-1, 1)

    # lde: fold the grouped depthwise 3x3 (channel multiplier 2) into the
    # following 1x1 -> one (2C, 9C) matrix over the 9 stacked taps of y.
    wE = p["lde_dw_w"][0::2, 0].reshape(C, 9)
    wO = p["lde_dw_w"][1::2, 0].reshape(C, 9)
    bE = p["lde_dw_b"][0::2]
    bO = p["lde_dw_b"][1::2]
    p0e = p["lde_p0_w"][:, 0::2]
    p0o = p["lde_p0_w"][:, 1::2]
    lde_M = (p0e[:, None, :] * jnp.transpose(wE)[None, :, :]
             + p0o[:, None, :] * jnp.transpose(wO)[None, :, :]).reshape(2 * C, 9 * C)
    lde_b0 = p0e @ bE + p0o @ bO + p["lde_p0_b"]

    # PCFN conv_1 as one (p, 9p) matrix over the 9 stacked taps of h1.
    pc1_big = jnp.transpose(p["p1_w"], (0, 2, 3, 1)).reshape(p_dim, 9 * p_dim)

    # C-column 1x1 weights stacked into one operand; all biases in one column.
    w_cx = jnp.concatenate([p["l0_w"], p["l1_w"], p["l2_w"], p["p0_w"]], axis=0)
    b_all = jnp.concatenate([
        col(p["l0_b"]), col(p["l1_b"]), col(p["l2_b"]), col(p["dw_b"]),
        col(lde_b0), col(p["lde_p1_b"]), col(p["p0_b"]), col(p["p1_b"]),
        col(p["p2_b"]),
    ], axis=0)

    return [
        jnp.asarray(w_cx, f32),
        jnp.asarray(p["dw_w"].reshape(C, 9), f32),
        jnp.asarray(lde_M, f32),
        jnp.asarray(p["lde_p1_w"], f32),
        jnp.asarray(pc1_big, f32),
        jnp.asarray(p["p2_w"], f32),
        jnp.asarray(b_all, f32),
    ]


# ------------------------------ pure-JAX reference -----------------------------

def fmb_reference(x, p, p_dim):
    """NCHW reference built from standard ops (pad / reshape / repeat)."""
    N, C, H, W = x.shape
    hi = jax.lax.Precision.HIGHEST

    def norm_c(t):
        n = jnp.sqrt(jnp.sum(t * t, axis=1, keepdims=True))
        return t / jnp.maximum(n, EPS)

    def conv1x1(t, w, b):
        return jnp.einsum("oc,nchw->nohw", w, t, precision=hi) + b[None, :, None, None]

    def dwconv3x3(t, w, b):
        Hh, Ww = t.shape[2], t.shape[3]
        tp = jnp.pad(t, ((0, 0), (0, 0), (1, 1), (1, 1)))
        acc = jnp.zeros_like(t)
        for kh in range(3):
            for kw in range(3):
                acc = acc + tp[:, :, kh:kh + Hh, kw:kw + Ww] * w[:, 0, kh, kw][None, :, None, None]
        return acc + b[None, :, None, None]

    def conv3x3(t, w, b):
        Hh, Ww = t.shape[2], t.shape[3]
        tp = jnp.pad(t, ((0, 0), (0, 0), (1, 1), (1, 1)))
        acc = 0.0
        for kh in range(3):
            for kw in range(3):
                acc = acc + jnp.einsum("oc,nchw->nohw", w[:, :, kh, kw],
                                       tp[:, :, kh:kh + Hh, kw:kw + Ww], precision=hi)
        return acc + b[None, :, None, None]

    # ----- SMFA -----
    f = norm_c(x)
    yx = conv1x1(f, p["l0_w"], p["l0_b"])
    y, xb = yx[:, :C], yx[:, C:]
    Hs, Ws = H // _DS, W // _DS
    pooled = jnp.max(xb.reshape(N, C, Hs, _DS, Ws, _DS), axis=(3, 5))
    x_s = dwconv3x3(pooled, p["dw_w"], p["dw_b"])
    x_v = jnp.var(xb, axis=(2, 3), keepdims=True, ddof=1)
    gate = _gelu(conv1x1(x_s + x_v, p["l1_w"], p["l1_b"]))
    up = jnp.repeat(jnp.repeat(gate, _DS, axis=2), _DS, axis=3)
    x_l = xb * up
    d = dwconv3x3(jnp.repeat(y, 2, axis=1), p["lde_dw_w"], p["lde_dw_b"])
    d = _gelu(conv1x1(d, p["lde_p0_w"], p["lde_p0_b"]))
    y_d = conv1x1(d, p["lde_p1_w"], p["lde_p1_b"])
    x1 = conv1x1(x_l + y_d, p["l2_w"], p["l2_b"]) + x
    # ----- PCFN -----
    g = norm_c(x1)
    h = _gelu(conv1x1(g, p["p0_w"], p["p0_b"]))
    h1 = _gelu(conv3x3(h[:, :p_dim], p["p1_w"], p["p1_b"]))
    hcat = jnp.concatenate([h1, h[:, p_dim:]], axis=1)
    return conv1x1(hcat, p["p2_w"], p["p2_b"]) + x1


if __name__ == "__main__":
    key = jax.random.PRNGKey(0)
    dim, N, H, W = 16, 2, 16, 16
    kx, kp = jax.random.split(key)
    x = jax.random.normal(kx, (N, dim, H, W), jnp.float32)          # NCHW, as in PyTorch
    params, hidden, p_dim = init_params(kp, dim, ffn_scale=2.0)
    kparams = prep_params(params, dim, hidden, p_dim)

    fwd = jax.jit(functools.partial(fmb_forward, roll_numpy=_roll_is_numpy()))
    out = fwd(x, kparams)
    jax.block_until_ready(out)
    assert out.shape == (N, dim, H, W) and out.dtype == jnp.float32

    ref = fmb_reference(x, params, p_dim)
    err = float(jnp.max(jnp.abs(out - ref)))
    assert err < 3e-2, f"kernel mismatch vs pure-JAX reference: max|diff|={err}"
    print("KERNEL_OK")
</pallas_src>

<mosaic_0001>
module attributes {stable_mosaic.version = 11 : i64} {
  func.func @k(%arg0: memref<8x128xf32, #tpu.memory_space<vmem>>, %arg1: memref<8x128xf32, #tpu.memory_space<vmem>>) attributes {dimension_semantics = [], scalar_prefetch = 0 : i64, scratch_operands = 0 : i64, tpu.core_type = #tpu.core_type<tc>} {
    %c0 = arith.constant 0 : index
    %c0_0 = arith.constant 0 : index
    %0 = vector.load %arg0[%c0, %c0_0] : memref<8x128xf32, #tpu.memory_space<vmem>>, vector<8x128xf32>
    %c1_i32 = arith.constant 1 : i32
    %1 = tpu.dynamic_rotate %0 by %c1_i32 dim 1 : vector<8x128xf32>, i32 -> vector<8x128xf32>
    %c0_1 = arith.constant 0 : index
    %c0_2 = arith.constant 0 : index
    %2 = vector.load %arg1[%c0_1, %c0_2] : memref<8x128xf32, #tpu.memory_space<vmem>>, vector<8x128xf32>
    tpu.vector_store %arg1[%c0_1, %c0_2], %1 {strides = array<i32>} : memref<8x128xf32, #tpu.memory_space<vmem>>, vector<8x128xf32>,
    return
  }
}

</mosaic_0001>

<llo_original>
// kernel: tpu_custom_call.1
$region0: #{tpu_custom_call.1}
  #allocation0 [shape = 'u32[]', space=smem, size = 0x4, offset = 0x4, fixed_abs, tag = 'smem constant byte address 0x4 - core index']
  #allocation1 [shape = 'u32[144,128]{1,0:T(1,128)}', space=vmem, size = 0x12000, scoped, tag = 'internal scratch']
  %s0 = inlined_call_operand.hbm [shape: f32[8,128], index: 0, kind: input, shape index: {}]
  %s1 = inlined_call_operand.hbm [shape: f32[8,128], index: 1, kind: output, shape index: {}]
  %s2 = sld [smem:[#allocation0]]
  $region18: #{tpu_custom_call.1} parent=0
    _
  %s4 = ssub.s32 1, %s2
  %s5 = scalar_select 0, %s4, %s2
  $region1: #{tpu_custom_call.1} parent=0
    #allocation2 [shape = 'u8[4096]{0}', space=vmem, size = 0x1000, scoped, tag = 'input window, operand 0, single buffered']
    #allocation3 [shape = 's32[1]{0}', space=sflag, size = 0x4, scoped, tag = 'scoped memory for tpu_custom_call.1']
    #allocation4 [shape = 's32[1]{0}', space=sflag, size = 0x4, scoped, tag = 'scoped memory for tpu_custom_call.1']
    #allocation5 [shape = 'u8[4096]{0}', space=vmem, size = 0x1000, scoped, tag = 'output window, operand 0, single buffered']
    %6 = vsyncpa [#allocation3], 0
    %7 = vsyncpa [#allocation4], 0
    // Predicated region
    $region2: #{tpu_custom_call.1} parent=1 // pred_check
      _
    $region3: #{tpu_custom_call.1} parent=1 // pred_check_branch
      %9 = sbr.rel (0) target = $region5
    $region4: #{tpu_custom_call.1} parent=1 // pred_region
      %s11 = ssub.s32 128, 128
      %12 = vsyncadd [#allocation3], %s11
      %s14 = sshll.u32 [#allocation2], 4
      %s15 = int_to_ptr.vmem [resolvable:$true] %s14
      %17 = dma.hbm_to_vmem [thread:$0]  %s0, 128, %s15, [#allocation3]
    $region5: #{tpu_custom_call.1} parent=1 // pred_fallthru
      _
    // Predicated region
    $region6: #{tpu_custom_call.1} parent=1 // pred_check
      _
    $region7: #{tpu_custom_call.1} parent=1 // pred_check_branch
      %19 = sbr.rel (0) target = $region9
    $region8: #{tpu_custom_call.1} parent=1 // pred_region
      %20 = dma.done [#allocation3], 128
    $region9: #{tpu_custom_call.1} parent=1 // pred_fallthru
      _
    %v21 = vld [vmem:[#allocation2] sm:$0xff]
    %22 = vrot.lane.b32.xlu0 %v21, 1
    %v23 = vpop.permute.xlu0 %22
    %24 = vst [vmem:[#allocation5] sm:$0xff] %v23
    // Predicated region
    $region10: #{tpu_custom_call.1} parent=1 // pred_check
      _
    $region11: #{tpu_custom_call.1} parent=1 // pred_check_branch
      %26 = sbr.rel (0) target = $region13
    $region12: #{tpu_custom_call.1} parent=1 // pred_region
      %s28 = ssub.s32 128, 128
      %29 = vsyncadd [#allocation4], %s28
      %s31 = sshll.u32 [#allocation5], 4
      %s32 = int_to_ptr.vmem [resolvable:$true] %s31
      %34 = dma.vmem_to_hbm [thread:$0]  %s32, 128, %s1, [#allocation4]
    $region13: #{tpu_custom_call.1} parent=1 // pred_fallthru
      _
    // Predicated region
    $region14: #{tpu_custom_call.1} parent=1 // pred_check
      _
    $region15: #{tpu_custom_call.1} parent=1 // pred_check_branch
      %36 = sbr.rel (0) target = $region17
    $region16: #{tpu_custom_call.1} parent=1 // pred_region
      %37 = dma.done [#allocation4], 128
    $region17: #{tpu_custom_call.1} parent=1 // pred_fallthru
      _
    %38 = vsyncpa [#allocation3], 1
    %39 = vsyncpa [#allocation4], 1

</llo_original>
